<compile_context>
chip_gen: v5e
topology: v5e:2x2
jax: 0.10.0
libtpu: 0.0.40
codegen_flags: <defaults>
</compile_context>

<pallas_src>
import functools

import jax
import jax.numpy as jnp
from jax.experimental import pallas as pl
from jax.experimental.pallas import tpu as pltpu

EPS = 1e-5        # PyTorch BatchNorm1d default eps
LANES = 128


def _round_up(x, m):
    return (x + m - 1) // m * m


def _sublane_pack(dtype):
    # Sub-32-bit dtypes pack rows 2x/4x per sublane: 8 f32, 16 bf16, 32 int8.
    return max(8, 32 // jnp.dtype(dtype).itemsize)


def _vmem_limit_bytes():
    """Scoped-VMEM budget, generation aware (v5e/v6e 128 MiB, v7x 64 MiB/TC)."""
    cap = 64 << 20
    try:
        cap = int(getattr(pltpu.get_tpu_info(), "vmem_capacity_bytes", cap)) or cap
    except Exception:
        pass
    return min(cap * 3 // 4, 96 << 20)


# ---------------------------------------------------------------------------
# Fused path: stats + normalize + linear head in one kernel (x read once).
# ---------------------------------------------------------------------------
def _fused_kernel(x_ref, gamma_ref, w_ref, bias_ref, o_ref, *, n_rows):
    x = x_ref[...].astype(jnp.float32)                         # (N, C)
    inv_n = jnp.float32(1.0 / n_rows)
    mean = jnp.sum(x, axis=0, keepdims=True) * inv_n           # (1, C)
    xc = x - mean
    var = jnp.sum(xc * xc, axis=0, keepdims=True) * inv_n      # two-pass, biased (/N)
    s = jax.lax.rsqrt(var + EPS) * gamma_ref[...]              # (1, C)
    xs = (xc * s).astype(w_ref.dtype)
    out = jnp.dot(xs, w_ref[...], preferred_element_type=jnp.float32) + bias_ref[...]
    o_ref[...] = out.astype(o_ref.dtype)


# ---------------------------------------------------------------------------
# Tiled path, Phase 1: shifted sum / sum-of-squares accumulated over N tiles.
# ---------------------------------------------------------------------------
def _stats_kernel(x_ref, shift_ref, sum_ref, sumsq_ref, *, n_rows, tile_n, mask_rows):
    i = pl.program_id(0)

    @pl.when(i == 0)
    def _init():
        sum_ref[...] = jnp.zeros_like(sum_ref)
        sumsq_ref[...] = jnp.zeros_like(sumsq_ref)

    d = x_ref[...].astype(jnp.float32) - shift_ref[...]        # shifted for stability
    if mask_rows:                                              # static: ragged last tile
        row = jax.lax.broadcasted_iota(jnp.int32, d.shape, 0) + i * tile_n
        d = jnp.where(row < n_rows, d, 0.0)
    sum_ref[...] += jnp.sum(d, axis=0, keepdims=True)
    sumsq_ref[...] += jnp.sum(d * d, axis=0, keepdims=True)


# ---------------------------------------------------------------------------
# Tiled path, Phase 2: out_tile = (x_tile * s) @ W + b_eff  (BN folded in).
# ---------------------------------------------------------------------------
def _apply_kernel(x_ref, s_ref, w_ref, b_eff_ref, o_ref):
    # (x * s) is a (1,C) lane-broadcast VPU multiply that co-issues with the
    # MXU push; BN's shift term is folded into b_eff -> single matmul.
    xs = (x_ref[...].astype(jnp.float32) * s_ref[...]).astype(w_ref.dtype)
    out = jnp.dot(xs, w_ref[...], preferred_element_type=jnp.float32) + b_eff_ref[...]
    o_ref[...] = out.astype(o_ref.dtype)


def prebn_forward(x, gamma, beta, w, b, *, block_n=None, fuse_threshold_bytes=None):
    """PreBN forward.

    x: (N, C); gamma/beta: (C,) or (1, C); w: (C, K); b: (K,) or (1, K) -> (N, K)
    """
    n, c = x.shape
    k = w.shape[1]
    out_dtype = x.dtype
    mm_dtype = (jnp.bfloat16 if jnp.dtype(x.dtype) == jnp.dtype(jnp.bfloat16)
                else jnp.float32)
    x_bytes = jnp.dtype(x.dtype).itemsize
    mm_bytes = jnp.dtype(mm_dtype).itemsize
    out_bytes = jnp.dtype(out_dtype).itemsize

    gamma = jnp.asarray(gamma, jnp.float32).reshape(1, c)
    beta = jnp.asarray(beta, jnp.float32).reshape(1, c)
    b = jnp.asarray(b, jnp.float32).reshape(1, k)
    w_f32 = jnp.asarray(w, jnp.float32).reshape(c, k)

    # Lane-dense K padding of the (tiny) weight only; x is never padded/copied.
    kp = _round_up(k, LANES)
    w_mm = jnp.zeros((c, kp), mm_dtype).at[:, :k].set(w_f32.astype(mm_dtype))

    vmem_limit = _vmem_limit_bytes()
    pack = _sublane_pack(x.dtype)

    # -------- fused single-call path (x fits comfortably in scoped VMEM) ----
    fused_est = (n * c * (x_bytes + 8 + mm_bytes)     # x native + f32 temps + xs
                 + c * kp * mm_bytes                   # W
                 + n * kp * (4 + out_bytes)            # f32 acc + output
                 + (1 << 20))
    threshold = vmem_limit // 2 if fuse_threshold_bytes is None else fuse_threshold_bytes
    if fused_est <= threshold:
        bias_lin = b + beta @ w_f32                    # (1, K), batch-independent
        bias_p = jnp.zeros((1, kp), jnp.float32).at[:, :k].set(bias_lin)
        out = pl.pallas_call(
            functools.partial(_fused_kernel, n_rows=n),
            out_shape=jax.ShapeDtypeStruct((n, kp), out_dtype),
            compiler_params=pltpu.CompilerParams(vmem_limit_bytes=vmem_limit),
        )(x, gamma, w_mm, bias_p)
        return out[:, :k]

    # -------- tiled two-phase path (large N, x streamed from HBM) -----------
    if block_n is None:
        const_bytes = 2 * c * kp * mm_bytes + (2 << 20)
        per_row = 2 * c * x_bytes + 2 * kp * out_bytes
        tn = max(pack, min(2048, (vmem_limit - const_bytes) // per_row))
    else:
        tn = max(pack, min(block_n, 2048))
    tn = min(tn, _round_up(n, pack))
    tn = max(pack, tn // pack * pack)
    nt = -(-n // tn)                                   # cdiv
    mask_rows = (n % tn) != 0

    # Phase 1: shifted batch statistics (shift = x[0] ~ typical feature value).
    shift = x[0:1, :].astype(jnp.float32)              # (1, C)
    sum_d, sumsq_d = pl.pallas_call(
        functools.partial(_stats_kernel, n_rows=n, tile_n=tn, mask_rows=mask_rows),
        out_shape=(jax.ShapeDtypeStruct((1, c), jnp.float32),
                   jax.ShapeDtypeStruct((1, c), jnp.float32)),
        grid=(nt,),
        in_specs=[
            pl.BlockSpec((tn, c), lambda i: (i, 0)),   # x tile
            pl.BlockSpec((1, c), lambda i: (0, 0)),    # shift (fetched once)
        ],
        out_specs=(
            pl.BlockSpec((1, c), lambda i: (0, 0)),    # VMEM-resident accumulator
            pl.BlockSpec((1, c), lambda i: (0, 0)),
        ),
        compiler_params=pltpu.CompilerParams(
            dimension_semantics=("arbitrary",), vmem_limit_bytes=vmem_limit),
    )(x, shift)
    # TODO(synk): v7x dual-TC -- add a leading 2-way "parallel" axis with two
    # partial accumulators so both TensorCores stream half of x in Phase 1.

    # Finalize (O(C*K), once) in plain XLA: fold BN into (s, b_eff).
    inv_n = 1.0 / n
    mean_d = sum_d * inv_n
    mean = shift + mean_d
    var = jnp.maximum(sumsq_d * inv_n - mean_d * mean_d, 0.0)  # biased (/N)
    s = jax.lax.rsqrt(var + EPS) * gamma                       # (1, C)
    b_eff = b + (beta - mean * s) @ w_f32                      # (1, K)
    b_eff_p = jnp.zeros((1, kp), jnp.float32).at[:, :k].set(b_eff)

    # Phase 2: normalize+classify as one lane-dense matmul per N tile.
    out = pl.pallas_call(
        _apply_kernel,
        out_shape=jax.ShapeDtypeStruct((n, kp), out_dtype),
        grid=(nt,),
        in_specs=[
            pl.BlockSpec((tn, c), lambda i: (i, 0)),   # x tile
            pl.BlockSpec((1, c), lambda i: (0, 0)),    # s (fetched once)
            pl.BlockSpec((c, kp), lambda i: (0, 0)),   # W (fetched once)
            pl.BlockSpec((1, kp), lambda i: (0, 0)),   # b_eff
        ],
        out_specs=pl.BlockSpec((tn, kp), lambda i: (i, 0)),
        compiler_params=pltpu.CompilerParams(
            dimension_semantics=("parallel",), vmem_limit_bytes=vmem_limit),
    )(x, s, w_mm, b_eff_p)
    return out[:, :k]


def _reference(x, gamma, beta, w, b):
    """Plain-JAX reference of the PyTorch semantics."""
    mean = jnp.mean(x, axis=0, keepdims=True)
    var = jnp.mean((x - mean) ** 2, axis=0, keepdims=True)     # biased (/N)
    x_hat = (x - mean) / jnp.sqrt(var + EPS) * gamma + beta
    return x_hat @ w + b


if __name__ == "__main__":
    key = jax.random.PRNGKey(0)
    kx, kg, kbt, kw, kb, kx2 = jax.random.split(key, 6)

    # Small shapes consistent with the module: batch=24, num_features=32,
    # classifier head num_classes=8.
    N, C, K = 24, 32, 8
    x = jax.random.normal(kx, (N, C), dtype=jnp.float32)
    gamma = 1.0 + 0.1 * jax.random.normal(kg, (1, C), dtype=jnp.float32)
    beta = 0.1 * jax.random.normal(kbt, (1, C), dtype=jnp.float32)
    w = jax.random.normal(kw, (C, K), dtype=jnp.float32) * 0.05
    b = jax.random.normal(kb, (1, K), dtype=jnp.float32) * 0.01

    # 1) Fused single-call path (typical DomainBed sizes: x fits in VMEM).
    fwd_fused = jax.jit(prebn_forward)
    out_fused = jax.block_until_ready(fwd_fused(x, gamma, beta, w, b))
    ref = _reference(x, gamma, beta, w, b)
    assert out_fused.shape == (N, K)
    assert jnp.allclose(out_fused, ref, atol=1e-4, rtol=1e-4), "fused path mismatch"

    # 2) Tiled streaming path, forced with tiny tiles + a ragged last N tile
    #    (exercises multi-tile shifted-stats accumulation and row masking).
    N2 = 20
    x2 = jax.random.normal(kx2, (N2, C), dtype=jnp.float32) + 3.0  # nonzero mean
    fwd_tiled = jax.jit(functools.partial(prebn_forward, block_n=8,
                                          fuse_threshold_bytes=0))
    out_tiled = jax.block_until_ready(fwd_tiled(x2, gamma, beta, w, b))
    ref2 = _reference(x2, gamma, beta, w, b)
    assert out_tiled.shape == (N2, K)
    assert jnp.allclose(out_tiled, ref2, atol=1e-4, rtol=1e-4), "tiled path mismatch"

    print("KERNEL_OK")
</pallas_src>

<mosaic_0001>
module attributes {stable_mosaic.version = 11 : i64} {
  func.func @_fused_kernel(%arg0: memref<24x32xf32, #tpu.memory_space<vmem>>, %arg1: memref<1x32xf32, #tpu.memory_space<vmem>>, %arg2: memref<32x128xf32, #tpu.memory_space<vmem>>, %arg3: memref<1x128xf32, #tpu.memory_space<vmem>>, %arg4: memref<24x128xf32, #tpu.memory_space<vmem>>) attributes {dimension_semantics = [], scalar_prefetch = 0 : i64, scratch_operands = 0 : i64, tpu.core_type = #tpu.core_type<tc>} {
    %c0 = arith.constant 0 : index
    %c0_0 = arith.constant 0 : index
    %0 = vector.load %arg0[%c0, %c0_0] : memref<24x32xf32, #tpu.memory_space<vmem>>, vector<24x32xf32>
    %cst = arith.constant dense<0.000000e+00> : vector<32xf32>
    %1 = vector.multi_reduction <add>, %0, %cst [0] : vector<24x32xf32> to vector<32xf32>
    %2 = vector.shape_cast %1 : vector<32xf32> to vector<1x32xf32>
    %cst_1 = arith.constant 0.0416666679 : f32
    %3 = vector.broadcast %cst_1 : f32 to vector<1x32xf32>
    %4 = arith.mulf %2, %3 : vector<1x32xf32>
    %5 = vector.broadcast %4 : vector<1x32xf32> to vector<24x32xf32>
    %6 = arith.subf %0, %5 : vector<24x32xf32>
    %7 = arith.mulf %6, %6 : vector<24x32xf32>
    %cst_2 = arith.constant dense<0.000000e+00> : vector<32xf32>
    %8 = vector.multi_reduction <add>, %7, %cst_2 [0] : vector<24x32xf32> to vector<32xf32>
    %9 = vector.shape_cast %8 : vector<32xf32> to vector<1x32xf32>
    %cst_3 = arith.constant 0.0416666679 : f32
    %10 = vector.broadcast %cst_3 : f32 to vector<1x32xf32>
    %11 = arith.mulf %9, %10 : vector<1x32xf32>
    %cst_4 = arith.constant 9.99999974E-6 : f32
    %12 = vector.broadcast %cst_4 : f32 to vector<1x32xf32>
    %13 = arith.addf %11, %12 : vector<1x32xf32>
    %14 = math.rsqrt %13 : vector<1x32xf32>
    %c0_5 = arith.constant 0 : index
    %c0_6 = arith.constant 0 : index
    %15 = vector.load %arg1[%c0_5, %c0_6] : memref<1x32xf32, #tpu.memory_space<vmem>>, vector<1x32xf32>
    %16 = arith.mulf %14, %15 : vector<1x32xf32>
    %17 = vector.broadcast %16 : vector<1x32xf32> to vector<24x32xf32>
    %18 = arith.mulf %6, %17 : vector<24x32xf32>
    %c0_7 = arith.constant 0 : index
    %c0_8 = arith.constant 0 : index
    %19 = vector.load %arg2[%c0_7, %c0_8] : memref<32x128xf32, #tpu.memory_space<vmem>>, vector<32x128xf32>
    %cst_9 = arith.constant dense<0.000000e+00> : vector<24x128xf32>
    %20 = tpu.matmul %18, %19, %cst_9 {dimension_numbers = #tpu.dot_dimension_numbers<[1], [0], [0], [1], [0, 0, 1, 1], [], []>} : vector<24x32xf32>, vector<32x128xf32>, vector<24x128xf32> -> vector<24x128xf32>
    %c0_10 = arith.constant 0 : index
    %c0_11 = arith.constant 0 : index
    %21 = vector.load %arg3[%c0_10, %c0_11] : memref<1x128xf32, #tpu.memory_space<vmem>>, vector<1x128xf32>
    %22 = vector.broadcast %21 : vector<1x128xf32> to vector<24x128xf32>
    %23 = arith.addf %20, %22 : vector<24x128xf32>
    %c0_12 = arith.constant 0 : index
    %c0_13 = arith.constant 0 : index
    %24 = vector.load %arg4[%c0_12, %c0_13] : memref<24x128xf32, #tpu.memory_space<vmem>>, vector<24x128xf32>
    tpu.vector_store %arg4[%c0_12, %c0_13], %23 {strides = array<i32>} : memref<24x128xf32, #tpu.memory_space<vmem>>, vector<24x128xf32>,
    return
  }
}

</mosaic_0001>

<llo_original>
// kernel: prebn_forward.1
$region0: #{prebn_forward.1}
  #allocation0 [shape = 'u32[]', space=smem, size = 0x4, offset = 0x4, fixed_abs, tag = 'smem constant byte address 0x4 - core index']
  #allocation1 [shape = 'u32[72,128]{1,0:T(1,128)}', space=vmem, size = 0x9000, scoped, tag = 'internal scratch']
  %s0 = inlined_call_operand.vmem [shape: f32[24,32], index: 0, kind: input, shape index: {}]
  %s1 = inlined_call_operand.vmem [shape: f32[1,32], index: 1, kind: input, shape index: {}]
  %s2 = inlined_call_operand.vmem [shape: f32[32,128], index: 2, kind: input, shape index: {}]
  %s3 = inlined_call_operand.vmem [shape: f32[1,128], index: 3, kind: input, shape index: {}]
  %s4 = inlined_call_operand.vmem [shape: f32[24,128], index: 4, kind: output, shape index: {}]
  %s5 = sld [smem:[#allocation0]]
  $region26: #{prebn_forward.1} parent=0
    _
  %s7 = ssub.s32 1, %s5
  %s8 = scalar_select 0, %s7, %s5
  // Predicated region
  $region2: #{prebn_forward.1} parent=0 // pred_check
    _
  $region3: #{prebn_forward.1} parent=0 // pred_check_branch
    %10 = sbr.rel (0) target = $region5
  $region4: #{prebn_forward.1} parent=0 // pred_region
    _
  $region5: #{prebn_forward.1} parent=0 // pred_fallthru
    _
  // Predicated region
  $region6: #{prebn_forward.1} parent=0 // pred_check
    _
  $region7: #{prebn_forward.1} parent=0 // pred_check_branch
    %12 = sbr.rel (0) target = $region9
  $region8: #{prebn_forward.1} parent=0 // pred_region
    _
  $region9: #{prebn_forward.1} parent=0 // pred_fallthru
    _
  // Predicated region
  $region10: #{prebn_forward.1} parent=0 // pred_check
    _
  $region11: #{prebn_forward.1} parent=0 // pred_check_branch
    %14 = sbr.rel (0) target = $region13
  $region12: #{prebn_forward.1} parent=0 // pred_region
    _
  $region13: #{prebn_forward.1} parent=0 // pred_fallthru
    _
  // Predicated region
  $region14: #{prebn_forward.1} parent=0 // pred_check
    _
  $region15: #{prebn_forward.1} parent=0 // pred_check_branch
    %16 = sbr.rel (0) target = $region17
  $region16: #{prebn_forward.1} parent=0 // pred_region
    _
  $region17: #{prebn_forward.1} parent=0 // pred_fallthru
    _
  %v17 = vld [vmem:[%s0] sm:$0xff]
  %v18 = vld [vmem:[%s0 + $0x8] sm:$0xff]
  %v19 = vld [vmem:[%s0 + $0x10] sm:$0xff]
  %vm20 = vcmask 261120
  %v21 = vsel %vm20, %v17, 0.0
  %v22 = vsel %vm20, %v18, 0.0
  %v23 = vadd.f32 %v21, %v22
  %v24 = vsel %vm20, %v19, 0.0
  %v25 = vadd.f32 %v23, %v24
  %v26 = vrot.slane %v25, 4
  %v27 = vadd.f32 %v25, %v26
  %v28 = vrot.slane %v27, 2
  %v29 = vadd.f32 %v27, %v28
  %v30 = vrot.slane %v29, 1
  %v31 = vadd.f32 %v29, %v30
  %v32 = vmul.f32 %v31, 0.041666668
  %v33 = vsub.f32 %v17, %v32
  %v34 = vsub.f32 %v18, %v32
  %v35 = vsub.f32 %v19, %v32
  %v36 = vmul.f32 %v33, %v33
  %v37 = vmul.f32 %v34, %v34
  %v38 = vmul.f32 %v35, %v35
  %v39 = vsel %vm20, %v36, 0.0
  %v40 = vsel %vm20, %v37, 0.0
  %v41 = vadd.f32 %v39, %v40
  %v42 = vsel %vm20, %v38, 0.0
  %v43 = vadd.f32 %v41, %v42
  %v44 = vrot.slane %v43, 4
  %v45 = vadd.f32 %v43, %v44
  %v46 = vrot.slane %v45, 2
  %v47 = vadd.f32 %v45, %v46
  %v48 = vrot.slane %v47, 1
  %v49 = vadd.f32 %v47, %v48
  %v50 = vmul.f32 %v49, 0.041666668
  %v51 = vadd.f32 %v50, 1e-05
  %v52 = vrsqrt.pop %v51
  %v53 = vmul.f32 %v52, %v51
  %v54 = vmul.f32 %v53, %v52
  %v55 = vmul.f32 0.5, %v54
  %v56 = vsub.f32 1.5, %v55
  %v57 = vmul.f32 %v52, %v56
  %vm58 = vweird.f32 %v51
  %vm59 = vweird.f32 %v52
  %vm60 = vmor %vm58, %vm59
  %v61 = vsel %vm60, %v52, %v57
  %v62 = vld [vmem:[%s1] sm:$0x1]
  %v63 = vmul.f32 %v61, %v62
  %v64 = vperm.slane %v63, 0
  %v65 = vmul.f32 %v33, %v64
  %v66 = vmul.f32 %v34, %v64
  %v67 = vmul.f32 %v35, %v64
  %v68 = vld [vmem:[%s2] sm:$0xff]
  %v69 = vld [vmem:[%s2 + $0x8] sm:$0xff]
  %v70 = vld [vmem:[%s2 + $0x10] sm:$0xff]
  %v71 = vld [vmem:[%s2 + $0x18] sm:$0xff]
  %v72 = vld [vmem:[%s3] sm:$0x1]
  %v74 = vperm.slane %v72, 0
  %v77 = vsel %vm20, %v65, 0
  %v80 = vsel %vm20, %v66, 0
  %v83 = vsel %vm20, %v67, 0
  %85 = vmatpush.msra.mxu0 0.0
  %86 = vmatpush.msra.mxu0 0.0
  %87 = vmatpush.msra.mxu0 0.0
  %88 = vmatpush.msra.mxu0 0.0
  %89 = vmatpush.msra.mxu0 0.0
  %90 = vmatpush.msra.mxu0 0.0
  %91 = vmatpush.msra.mxu0 0.0
  %92 = vmatpush.msra.mxu0 0.0
  %93 = vmatpush.msra.mxu0 0.0
  %94 = vmatpush.msra.mxu0 0.0
  %95 = vmatpush.msra.mxu0 0.0
  %96 = vmatpush.msra.mxu0 0.0
  %97 = vmatpush.msra.mxu0 %v71
  %98 = vmatpush.msra.mxu0 %v70
  %99 = vmatpush.msra.mxu0 %v69
  %100 = vmatpush.msra.mxu0 %v68
  %101 = vmatmul.f32.gmra.mxu0 %v77
  %v102 = vpop.f32.mrf.mxu0
  %v103 = vadd.f32 %v74, %v102
  %104 = vmatmul.f32.gmra.mxu0 %v80
  %v105 = vpop.f32.mrf.mxu0
  %v106 = vadd.f32 %v74, %v105
  %107 = vmatmul.f32.gmra.mxu0 %v83
  %v108 = vpop.f32.mrf.mxu0
  %v109 = vadd.f32 %v74, %v108
  %110 = vdwg.mxu0
  %111 = vst [vmem:[%s4] sm:$0xff] %v103
  %112 = vst [vmem:[%s4 + $0x8] sm:$0xff] %v106
  %113 = vst [vmem:[%s4 + $0x10] sm:$0xff] %v109
  // Predicated region
  $region18: #{prebn_forward.1} parent=0 // pred_check
    _
  $region19: #{prebn_forward.1} parent=0 // pred_check_branch
    %115 = sbr.rel (0) target = $region21
  $region20: #{prebn_forward.1} parent=0 // pred_region
    _
  $region21: #{prebn_forward.1} parent=0 // pred_fallthru
    _
  // Predicated region
  $region22: #{prebn_forward.1} parent=0 // pred_check
    _
  $region23: #{prebn_forward.1} parent=0 // pred_check_branch
    %117 = sbr.rel (0) target = $region25
  $region24: #{prebn_forward.1} parent=0 // pred_region
    _
  $region25: #{prebn_forward.1} parent=0 // pred_fallthru
    _

</llo_original>
